<compile_context>
chip_gen: v7x
topology: tpu7x:2x2x1
jax: 0.10.0
libtpu: 0.0.40
codegen_flags: <defaults>
</compile_context>

<pallas_src>
import functools
import numpy as np
import jax
import jax.numpy as jnp
from jax.experimental import pallas as pl
from jax.experimental.pallas import tpu as pltpu


# ------------------------------ Pallas kernel ---------------------------------

def _bottleneck_kernel(x_ref, w1_ref, b1_ref, w2_ref, b2_ref, w3_ref, b3_ref,
                       mneg_ref, mpos_ref, o_ref, *, H, W, dilation, pad):
    """grid = (N,).  One image per step; the full Bottleneck is fused here.

    x_ref : (1, Cin, HW)        bf16   input image (also the residual identity)
    w1    : (width, Cin)        bf16   conv1 (1x1) folded with bn1
    b1    : (width, 1)          f32
    w2    : (width, 9*width)    bf16   conv2 (3x3) taps folded into K, with bn2
    b2    : (width, 1)          f32
    w3    : (Cout, width)       bf16   conv3 (1x1) folded with bn3
    b3    : (Cout, 1)           f32
    mneg  : (1, HW)             f32    column mask  j >= dilation
    mpos  : (1, HW)             f32    column mask  j <  W - dilation
    o_ref : (1, Cout, HW)       f32
    """
    HW = H * W
    d = dilation

    x_bf = x_ref[0]                                          # (Cin, HW) bf16

    # ---- conv1 (1x1) + bn1 + relu -------------------------------------------
    h1 = jnp.dot(w1_ref[...], x_bf, preferred_element_type=jnp.float32)
    h1 = jnp.maximum(h1 + b1_ref[...], 0.0)                  # (width, HW) f32

    # ---- conv2 (3x3, padding=dilation, dilation=d) + bn2 + relu ---------------
    width = h1.shape[0]
    zpad = jnp.zeros((width, pad), dtype=jnp.float32)
    # zero-extend along the flattened-HW lane axis: out-of-image rows (top /
    # bottom) land in the zero pads; row-wrap along columns is fixed by masks.
    hflat = jnp.concatenate([zpad, h1, zpad], axis=1)        # (width, HW+2*pad)
    mneg = mneg_ref[...]
    mpos = mpos_ref[...]

    taps = []
    for ki in range(3):
        for kj in range(3):
            di = (ki - 1) * d
            dj = (kj - 1) * d
            s = di * W + dj
            t = hflat[:, pad + s: pad + s + HW]              # static lane slice
            if dj < 0:
                t = t * mneg
            elif dj > 0:
                t = t * mpos
            taps.append(t)
    # fold the 9 taps into the contraction dimension: K = 9*width
    h1_taps = jnp.concatenate(taps, axis=0).astype(jnp.bfloat16)   # (9*width, HW)
    h2 = jnp.dot(w2_ref[...], h1_taps, preferred_element_type=jnp.float32)
    h2 = jnp.maximum(h2 + b2_ref[...], 0.0)                  # (width, HW) f32

    # ---- conv3 (1x1) + bn3 + residual + relu ----------------------------------
    h3 = jnp.dot(w3_ref[...], h2.astype(jnp.bfloat16),
                 preferred_element_type=jnp.float32)
    out = h3 + b3_ref[...] + x_bf.astype(jnp.float32)
    o_ref[0] = jnp.maximum(out, 0.0)


# ------------------------------ wrapper ---------------------------------------

def bottleneck_forward(params, x):
    """x: (N, Cin, H, W) float32 -> (N, Cout, H, W) float32."""
    N, Cin, H, W = x.shape
    HW = H * W
    d = int(params["dilation"])
    width = params["w1"].shape[0]
    cout = params["w3"].shape[0]
    pad = ((d * W + d + 127) // 128) * 128      # lane-aligned zero extension

    x_flat = x.reshape(N, Cin, HW).astype(jnp.bfloat16)

    # column-index masks for the 3x3 taps (handle row wrap in flattened HW)
    j = (jnp.arange(HW, dtype=jnp.int32) % W).reshape(1, HW)
    mneg = (j >= d).astype(jnp.float32)
    mpos = (j < W - d).astype(jnp.float32)

    kernel = functools.partial(_bottleneck_kernel, H=H, W=W, dilation=d, pad=pad)
    const = lambda n: (0, 0)

    out = pl.pallas_call(
        kernel,
        out_shape=jax.ShapeDtypeStruct((N, cout, HW), jnp.float32),
        grid_spec=pltpu.PrefetchScalarGridSpec(
            num_scalar_prefetch=0,
            grid=(N,),
            in_specs=[
                pl.BlockSpec((1, Cin, HW), lambda n: (n, 0, 0)),   # x
                pl.BlockSpec((width, Cin), const),                 # w1
                pl.BlockSpec((width, 1), const),                   # b1
                pl.BlockSpec((width, 9 * width), const),           # w2
                pl.BlockSpec((width, 1), const),                   # b2
                pl.BlockSpec((cout, width), const),                # w3
                pl.BlockSpec((cout, 1), const),                    # b3
                pl.BlockSpec((1, HW), const),                      # mneg
                pl.BlockSpec((1, HW), const),                      # mpos
            ],
            out_specs=pl.BlockSpec((1, cout, HW), lambda n: (n, 0, 0)),
        ),
        compiler_params=pltpu.CompilerParams(
            dimension_semantics=("parallel",)),
    )(x_flat, params["w1"], params["b1"], params["w2"], params["b2"],
      params["w3"], params["b3"], mneg, mpos)

    return out.reshape(N, cout, H, W)


# ------------------------------ parameters ------------------------------------

def _fold_bn(w, gamma, beta, mean, var, eps=1e-5):
    scale = gamma / jnp.sqrt(var + eps)
    return w * scale[:, None, None, None], beta - mean * scale


def _rand_bn(key, c):
    ks = jax.random.split(key, 4)
    gamma = 1.0 + 0.1 * jax.random.normal(ks[0], (c,), jnp.float32)
    beta = 0.1 * jax.random.normal(ks[1], (c,), jnp.float32)
    mean = 0.1 * jax.random.normal(ks[2], (c,), jnp.float32)
    var = jax.random.uniform(ks[3], (c,), jnp.float32, minval=0.5, maxval=1.5)
    return gamma, beta, mean, var


def init_bottleneck_params(key, inplanes, planes, base_width=64, groups=1,
                           dilation=1, expansion=4):
    assert groups == 1, "groups>1 not implemented"
    width = int(planes * (base_width / 64.0)) * groups
    cout = planes * expansion
    assert cout == inplanes, "identity residual requires inplanes == planes*expansion"

    k = jax.random.split(key, 6)
    w1 = jax.random.normal(k[0], (width, inplanes, 1, 1), jnp.float32) / np.sqrt(inplanes)
    w2 = jax.random.normal(k[1], (width, width, 3, 3), jnp.float32) / np.sqrt(width * 9)
    w3 = jax.random.normal(k[2], (cout, width, 1, 1), jnp.float32) / np.sqrt(width)

    w1f, b1 = _fold_bn(w1, *_rand_bn(k[3], width))
    w2f, b2 = _fold_bn(w2, *_rand_bn(k[4], width))
    w3f, b3 = _fold_bn(w3, *_rand_bn(k[5], cout))

    # kernel-facing layouts; conv2 taps folded into K: index = (ki*3+kj)*width + ci
    w1k = w1f.reshape(width, inplanes).astype(jnp.bfloat16)
    w2k = jnp.transpose(w2f, (0, 2, 3, 1)).reshape(width, 9 * width).astype(jnp.bfloat16)
    w3k = w3f.reshape(cout, width).astype(jnp.bfloat16)

    return dict(
        dilation=dilation,
        w1=w1k, b1=b1.reshape(width, 1),
        w2=w2k, b2=b2.reshape(width, 1),
        w3=w3k, b3=b3.reshape(cout, 1),
        # folded f32 weights kept only for the pure-JAX reference check
        ref=dict(w1=w1f, w2=w2f, w3=w3f, b1=b1, b2=b2, b3=b3),
    )


# ------------------------------ pure-JAX reference -----------------------------

def bottleneck_reference(params, x):
    r = params["ref"]
    d = int(params["dilation"])

    def conv(h, w, b, pad, dil):
        y = jax.lax.conv_general_dilated(
            h, w, window_strides=(1, 1), padding=((pad, pad), (pad, pad)),
            rhs_dilation=(dil, dil),
            dimension_numbers=("NCHW", "OIHW", "NCHW"))
        return y + b.reshape(1, -1, 1, 1)

    h = jax.nn.relu(conv(x, r["w1"], r["b1"], 0, 1))
    h = jax.nn.relu(conv(h, r["w2"], r["b2"], d, d))
    h = conv(h, r["w3"], r["b3"], 0, 1)
    return jax.nn.relu(h + x)


# ------------------------------ driver -----------------------------------------

if __name__ == "__main__":
    key = jax.random.PRNGKey(0)
    kp, kx = jax.random.split(key)

    # Bottleneck(inplanes=32, planes=8): width = 8, out channels = planes*4 = 32
    N, inplanes, planes, H, W = 2, 32, 8, 16, 16
    params = init_bottleneck_params(kp, inplanes, planes)

    x = jax.random.normal(kx, (N, inplanes, H, W), jnp.float32)

    out = jax.block_until_ready(bottleneck_forward(params, x))
    assert out.shape == (N, planes * 4, H, W), out.shape
    assert bool(jnp.all(jnp.isfinite(out)))

    # correctness self-check vs f32 reference (loose tol: bf16 matmul operands)
    ref = jax.block_until_ready(bottleneck_reference(params, x))
    np.testing.assert_allclose(np.asarray(out), np.asarray(ref),
                               rtol=5e-2, atol=5e-2)

    print("KERNEL_OK")
</pallas_src>

<mosaic_0001>
module attributes {stable_mosaic.version = 11 : i64} {
  func.func @_bottleneck_kernel(%arg0: i32, %arg1: memref<1x32x256xbf16, #tpu.memory_space<vmem>>, %arg2: memref<8x32xbf16, #tpu.memory_space<vmem>>, %arg3: memref<8x1xf32, #tpu.memory_space<vmem>>, %arg4: memref<8x72xbf16, #tpu.memory_space<vmem>>, %arg5: memref<8x1xf32, #tpu.memory_space<vmem>>, %arg6: memref<32x8xbf16, #tpu.memory_space<vmem>>, %arg7: memref<32x1xf32, #tpu.memory_space<vmem>>, %arg8: memref<1x256xf32, #tpu.memory_space<vmem>>, %arg9: memref<1x256xf32, #tpu.memory_space<vmem>>, %arg10: memref<1x32x256xf32, #tpu.memory_space<vmem>>) attributes {dimension_semantics = [#tpu.dimension_semantics<parallel>], iteration_bounds = array<i64: 2>, scalar_prefetch = 0 : i64, scratch_operands = 0 : i64, tpu.core_type = #tpu.core_type<tc>, window_params = [{transform_indices = @transform_0, window_bounds = array<i64: 1, 32, 256>}, {pipeline_mode = #tpu.pipeline_mode<synchronous>, transform_indices = @transform_1, window_bounds = array<i64: 8, 32>}, {pipeline_mode = #tpu.pipeline_mode<synchronous>, transform_indices = @transform_2, window_bounds = array<i64: 8, 1>}, {pipeline_mode = #tpu.pipeline_mode<synchronous>, transform_indices = @transform_3, window_bounds = array<i64: 8, 72>}, {pipeline_mode = #tpu.pipeline_mode<synchronous>, transform_indices = @transform_4, window_bounds = array<i64: 8, 1>}, {pipeline_mode = #tpu.pipeline_mode<synchronous>, transform_indices = @transform_5, window_bounds = array<i64: 32, 8>}, {pipeline_mode = #tpu.pipeline_mode<synchronous>, transform_indices = @transform_6, window_bounds = array<i64: 32, 1>}, {pipeline_mode = #tpu.pipeline_mode<synchronous>, transform_indices = @transform_7, window_bounds = array<i64: 1, 256>}, {pipeline_mode = #tpu.pipeline_mode<synchronous>, transform_indices = @transform_8, window_bounds = array<i64: 1, 256>}, {transform_indices = @transform_9, window_bounds = array<i64: 1, 32, 256>}]} {
    %c0 = arith.constant 0 : index
    %c0_0 = arith.constant 0 : index
    %c0_1 = arith.constant 0 : index
    %0 = vector.load %arg1[%c0, %c0_0, %c0_1] : memref<1x32x256xbf16, #tpu.memory_space<vmem>>, vector<1x32x256xbf16>
    %1 = vector.shape_cast %0 : vector<1x32x256xbf16> to vector<32x256xbf16>
    %c0_2 = arith.constant 0 : index
    %c0_3 = arith.constant 0 : index
    %2 = vector.load %arg2[%c0_2, %c0_3] : memref<8x32xbf16, #tpu.memory_space<vmem>>, vector<8x32xbf16>
    %cst = arith.constant dense<0.000000e+00> : vector<8x256xf32>
    %3 = tpu.matmul %2, %1, %cst {dimension_numbers = #tpu.dot_dimension_numbers<[1], [0], [0], [1], [0, 0, 1, 1], [], []>} : vector<8x32xbf16>, vector<32x256xbf16>, vector<8x256xf32> -> vector<8x256xf32>
    %c0_4 = arith.constant 0 : index
    %c0_5 = arith.constant 0 : index
    %4 = vector.load %arg3[%c0_4, %c0_5] : memref<8x1xf32, #tpu.memory_space<vmem>>, vector<8x1xf32>
    %5 = vector.broadcast %4 : vector<8x1xf32> to vector<8x256xf32>
    %6 = arith.addf %3, %5 : vector<8x256xf32>
    %cst_6 = arith.constant 0.000000e+00 : f32
    %7 = vector.broadcast %cst_6 : f32 to vector<8x256xf32>
    %8 = arith.maximumf %6, %7 : vector<8x256xf32>
    %cst_7 = arith.constant 0.000000e+00 : f32
    %9 = vector.broadcast %cst_7 : f32 to vector<8x128xf32>
    %10 = tpu.concatenate %9, %8, %9 in 1 : vector<8x128xf32>, vector<8x256xf32>, vector<8x128xf32> -> vector<8x512xf32>
    %c0_8 = arith.constant 0 : index
    %c0_9 = arith.constant 0 : index
    %11 = vector.load %arg8[%c0_8, %c0_9] : memref<1x256xf32, #tpu.memory_space<vmem>>, vector<1x256xf32>
    %c0_10 = arith.constant 0 : index
    %c0_11 = arith.constant 0 : index
    %12 = vector.load %arg9[%c0_10, %c0_11] : memref<1x256xf32, #tpu.memory_space<vmem>>, vector<1x256xf32>
    %13 = vector.extract_strided_slice %10 {offsets = [0, 111], sizes = [8, 256], strides = [1, 1]} : vector<8x512xf32> to vector<8x256xf32>
    %14 = vector.broadcast %11 : vector<1x256xf32> to vector<8x256xf32>
    %15 = arith.mulf %13, %14 : vector<8x256xf32>
    %16 = vector.extract_strided_slice %10 {offsets = [0, 112], sizes = [8, 256], strides = [1, 1]} : vector<8x512xf32> to vector<8x256xf32>
    %17 = vector.extract_strided_slice %10 {offsets = [0, 113], sizes = [8, 256], strides = [1, 1]} : vector<8x512xf32> to vector<8x256xf32>
    %18 = vector.broadcast %12 : vector<1x256xf32> to vector<8x256xf32>
    %19 = arith.mulf %17, %18 : vector<8x256xf32>
    %20 = vector.extract_strided_slice %10 {offsets = [0, 127], sizes = [8, 256], strides = [1, 1]} : vector<8x512xf32> to vector<8x256xf32>
    %21 = vector.broadcast %11 : vector<1x256xf32> to vector<8x256xf32>
    %22 = arith.mulf %20, %21 : vector<8x256xf32>
    %23 = vector.extract_strided_slice %10 {offsets = [0, 128], sizes = [8, 256], strides = [1, 1]} : vector<8x512xf32> to vector<8x256xf32>
    %24 = vector.extract_strided_slice %10 {offsets = [0, 129], sizes = [8, 256], strides = [1, 1]} : vector<8x512xf32> to vector<8x256xf32>
    %25 = vector.broadcast %12 : vector<1x256xf32> to vector<8x256xf32>
    %26 = arith.mulf %24, %25 : vector<8x256xf32>
    %27 = vector.extract_strided_slice %10 {offsets = [0, 143], sizes = [8, 256], strides = [1, 1]} : vector<8x512xf32> to vector<8x256xf32>
    %28 = vector.broadcast %11 : vector<1x256xf32> to vector<8x256xf32>
    %29 = arith.mulf %27, %28 : vector<8x256xf32>
    %30 = vector.extract_strided_slice %10 {offsets = [0, 144], sizes = [8, 256], strides = [1, 1]} : vector<8x512xf32> to vector<8x256xf32>
    %31 = vector.extract_strided_slice %10 {offsets = [0, 145], sizes = [8, 256], strides = [1, 1]} : vector<8x512xf32> to vector<8x256xf32>
    %32 = vector.broadcast %12 : vector<1x256xf32> to vector<8x256xf32>
    %33 = arith.mulf %31, %32 : vector<8x256xf32>
    %34 = tpu.concatenate %15, %16, %19, %22, %23, %26, %29, %30, %33 in 0 : vector<8x256xf32>, vector<8x256xf32>, vector<8x256xf32>, vector<8x256xf32>, vector<8x256xf32>, vector<8x256xf32>, vector<8x256xf32>, vector<8x256xf32>, vector<8x256xf32> -> vector<72x256xf32>
    %35 = arith.truncf %34 : vector<72x256xf32> to vector<72x256xbf16>
    %c0_12 = arith.constant 0 : index
    %c0_13 = arith.constant 0 : index
    %36 = vector.load %arg4[%c0_12, %c0_13] : memref<8x72xbf16, #tpu.memory_space<vmem>>, vector<8x72xbf16>
    %cst_14 = arith.constant dense<0.000000e+00> : vector<8x256xf32>
    %37 = tpu.matmul %36, %35, %cst_14 {dimension_numbers = #tpu.dot_dimension_numbers<[1], [0], [0], [1], [0, 0, 1, 1], [], []>} : vector<8x72xbf16>, vector<72x256xbf16>, vector<8x256xf32> -> vector<8x256xf32>
    %c0_15 = arith.constant 0 : index
    %c0_16 = arith.constant 0 : index
    %38 = vector.load %arg5[%c0_15, %c0_16] : memref<8x1xf32, #tpu.memory_space<vmem>>, vector<8x1xf32>
    %39 = vector.broadcast %38 : vector<8x1xf32> to vector<8x256xf32>
    %40 = arith.addf %37, %39 : vector<8x256xf32>
    %cst_17 = arith.constant 0.000000e+00 : f32
    %41 = vector.broadcast %cst_17 : f32 to vector<8x256xf32>
    %42 = arith.maximumf %40, %41 : vector<8x256xf32>
    %c0_18 = arith.constant 0 : index
    %c0_19 = arith.constant 0 : index
    %43 = vector.load %arg6[%c0_18, %c0_19] : memref<32x8xbf16, #tpu.memory_space<vmem>>, vector<32x8xbf16>
    %44 = arith.truncf %42 : vector<8x256xf32> to vector<8x256xbf16>
    %cst_20 = arith.constant dense<0.000000e+00> : vector<32x256xf32>
    %45 = tpu.matmul %43, %44, %cst_20 {dimension_numbers = #tpu.dot_dimension_numbers<[1], [0], [0], [1], [0, 0, 1, 1], [], []>} : vector<32x8xbf16>, vector<8x256xbf16>, vector<32x256xf32> -> vector<32x256xf32>
    %c0_21 = arith.constant 0 : index
    %c0_22 = arith.constant 0 : index
    %46 = vector.load %arg7[%c0_21, %c0_22] : memref<32x1xf32, #tpu.memory_space<vmem>>, vector<32x1xf32>
    %47 = vector.broadcast %46 : vector<32x1xf32> to vector<32x256xf32>
    %48 = arith.addf %45, %47 : vector<32x256xf32>
    %49 = arith.extf %1 : vector<32x256xbf16> to vector<32x256xf32>
    %50 = arith.addf %48, %49 : vector<32x256xf32>
    %cst_23 = arith.constant 0.000000e+00 : f32
    %51 = vector.broadcast %cst_23 : f32 to vector<32x256xf32>
    %52 = arith.maximumf %50, %51 : vector<32x256xf32>
    %c0_24 = arith.constant 0 : index
    %c0_25 = arith.constant 0 : index
    %c0_26 = arith.constant 0 : index
    %53 = vector.load %arg10[%c0_24, %c0_25, %c0_26] : memref<1x32x256xf32, #tpu.memory_space<vmem>>, vector<1x32x256xf32>
    %54 = vector.shape_cast %53 : vector<1x32x256xf32> to vector<32x256xf32>
    %55 = vector.shape_cast %52 : vector<32x256xf32> to vector<1x32x256xf32>
    tpu.vector_store %arg10[%c0_24, %c0_25, %c0_26], %55 {strides = array<i32>} : memref<1x32x256xf32, #tpu.memory_space<vmem>>, vector<1x32x256xf32>,
    return
  }
  func.func @transform_0(%arg0: i32) -> (i32, i32, i32) {
    %c0_i32 = arith.constant 0 : i32
    %c0_i32_0 = arith.constant 0 : i32
    %c0_i32_1 = arith.constant 0 : i32
    return %arg0, %c0_i32, %c0_i32_0 : i32, i32, i32
  }
  func.func @transform_1(%arg0: i32) -> (i32, i32) {
    %c0_i32 = arith.constant 0 : i32
    %c0_i32_0 = arith.constant 0 : i32
    %c0_i32_1 = arith.constant 0 : i32
    return %c0_i32, %c0_i32_0 : i32, i32
  }
  func.func @transform_2(%arg0: i32) -> (i32, i32) {
    %c0_i32 = arith.constant 0 : i32
    %c0_i32_0 = arith.constant 0 : i32
    %c0_i32_1 = arith.constant 0 : i32
    return %c0_i32, %c0_i32_0 : i32, i32
  }
  func.func @transform_3(%arg0: i32) -> (i32, i32) {
    %c0_i32 = arith.constant 0 : i32
    %c0_i32_0 = arith.constant 0 : i32
    %c0_i32_1 = arith.constant 0 : i32
    return %c0_i32, %c0_i32_0 : i32, i32
  }
  func.func @transform_4(%arg0: i32) -> (i32, i32) {
    %c0_i32 = arith.constant 0 : i32
    %c0_i32_0 = arith.constant 0 : i32
    %c0_i32_1 = arith.constant 0 : i32
    return %c0_i32, %c0_i32_0 : i32, i32
  }
  func.func @transform_5(%arg0: i32) -> (i32, i32) {
    %c0_i32 = arith.constant 0 : i32
    %c0_i32_0 = arith.constant 0 : i32
    %c0_i32_1 = arith.constant 0 : i32
    return %c0_i32, %c0_i32_0 : i32, i32
  }
  func.func @transform_6(%arg0: i32) -> (i32, i32) {
    %c0_i32 = arith.constant 0 : i32
    %c0_i32_0 = arith.constant 0 : i32
    %c0_i32_1 = arith.constant 0 : i32
    return %c0_i32, %c0_i32_0 : i32, i32
  }
  func.func @transform_7(%arg0: i32) -> (i32, i32) {
    %c0_i32 = arith.constant 0 : i32
    %c0_i32_0 = arith.constant 0 : i32
    %c0_i32_1 = arith.constant 0 : i32
    return %c0_i32, %c0_i32_0 : i32, i32
  }
  func.func @transform_8(%arg0: i32) -> (i32, i32) {
    %c0_i32 = arith.constant 0 : i32
    %c0_i32_0 = arith.constant 0 : i32
    %c0_i32_1 = arith.constant 0 : i32
    return %c0_i32, %c0_i32_0 : i32, i32
  }
  func.func @transform_9(%arg0: i32) -> (i32, i32, i32) {
    %c0_i32 = arith.constant 0 : i32
    %c0_i32_0 = arith.constant 0 : i32
    %c0_i32_1 = arith.constant 0 : i32
    return %arg0, %c0_i32, %c0_i32_0 : i32, i32, i32
  }
}

</mosaic_0001>

<llo_original>
// kernel: tpu_custom_call.1
$region0: #{tpu_custom_call.1}
  #allocation0 [shape = 'u32[]', space=smem, size = 0x4, offset = 0x4, fixed_abs, tag = 'smem constant byte address 0x4 - core index']
  #allocation1 [shape = 'u32[144,128]{1,0:T(1,128)}', space=vmem, size = 0x12000, scoped, tag = 'internal scratch']
  %s0 = inlined_call_operand.vmem [shape: bf16[2,32,256], index: 0, kind: input, shape index: {}]
  %s1 = inlined_call_operand.vmem [shape: bf16[8,32], index: 1, kind: input, shape index: {}]
  %s2 = inlined_call_operand.vmem [shape: f32[8,1], index: 2, kind: input, shape index: {}]
  %s3 = inlined_call_operand.vmem [shape: bf16[8,72], index: 3, kind: input, shape index: {}]
  %s4 = inlined_call_operand.vmem [shape: f32[8,1], index: 4, kind: input, shape index: {}]
  %s5 = inlined_call_operand.vmem [shape: bf16[32,8], index: 5, kind: input, shape index: {}]
  %s6 = inlined_call_operand.vmem [shape: f32[32,1], index: 6, kind: input, shape index: {}]
  %s7 = inlined_call_operand.vmem [shape: f32[1,256], index: 7, kind: input, shape index: {}]
  %s8 = inlined_call_operand.vmem [shape: f32[1,256], index: 8, kind: input, shape index: {}]
  %s9 = inlined_call_operand.hbm [shape: f32[2,32,256], index: 9, kind: output, shape index: {}]
  %s10 = sld [smem:[#allocation0]]
  $region69: #{tpu_custom_call.1} parent=0
    _
  %s12 = ssub.s32 1, %s10
  %s13 = scalar_select 0, %s12, %s10
  $region1: #{tpu_custom_call.1} parent=0
    #allocation2 [shape = 'u8[65536]{0}', space=vmem, size = 0x10000, scoped, tag = 'output window, operand 0']
    #allocation3 [shape = 's32[2]{0}', space=sflag, size = 0x8, scoped, tag = 'scoped memory for tpu_custom_call.1']
    %14 = vsyncpa [#allocation3], 0
    %s15 = scalar_lea.sflag [#allocation3], 1
    %16 = vsyncpa %s15, 0
    loop: start=0, step=1, limit=4
    $region2: #{tpu_custom_call.1} parent=1 // loop_pre_header
      _
    $region3: #{tpu_custom_call.1} parent=1 // loop_header
      %s18 = sphi 0, %s22
      %p19 = scmp.ge.s32.totalorder %s18, 4
      %s28 = sphi 0, %s30
      %s31 = sphi 0, %s28
      %s32 = sphi 0, %s31
      %s48 = sphi 0, %s32
      %s52 = sphi 0, %s52
      %s54 = sphi 0, %s52
      %s55 = sphi 0, %s54
      %s69 = sphi 0, %s55
      %s73 = sphi 0, %s73
      %s75 = sphi 0, %s73
      %s76 = sphi 0, %s75
      %s90 = sphi 0, %s76
      %s94 = sphi 0, %s94
      %s96 = sphi 0, %s94
      %s97 = sphi 0, %s96
      %s111 = sphi 0, %s97
      %s115 = sphi 0, %s115
      %s117 = sphi 0, %s115
      %s118 = sphi 0, %s117
      %s132 = sphi 0, %s118
      %s136 = sphi 0, %s136
      %s138 = sphi 0, %s136
      %s139 = sphi 0, %s138
      %s153 = sphi 0, %s139
      %s157 = sphi 0, %s157
      %s159 = sphi 0, %s157
      %s160 = sphi 0, %s159
      %s174 = sphi 0, %s160
      %s178 = sphi 0, %s178
      %s180 = sphi 0, %s178
      %s181 = sphi 0, %s180
      %s195 = sphi 0, %s181
      %s199 = sphi 0, %s199
      %s201 = sphi 0, %s199
      %s202 = sphi 0, %s201
      %s216 = sphi 0, %s202
      %s222 = sphi 0, %s224
      %s225 = sphi 0, %s222
      %s226 = sphi 0, %s225
      %s242 = sphi 0, %s226
    $region4: #{tpu_custom_call.1} parent=1 // loop_header_branch
      %21 = sbr.rel (%p19) target = $region8
    $region5: #{tpu_custom_call.1} parent=1 // loop_body
      %s23 = ssub.s32 %s18, 1
      %s24 = ssub.s32 %s18, 2
      %s25 = sadd.s32 %s18, 1
      %s26 = ssub.s32 %s18, %s25
      %p27 = scmp.eq.s32.totalorder %s26, 0
      %s29 = sadd.s32 %s28, 1
      %s30 = scalar_select %p27, %s28, %s29
      %p33 = pneg %p27
      %p34 = scmp.eq.s32.totalorder %s18, 1
      %p35 = por %p33, %p34
      %p36 = scmp.ne.s32.totalorder %s28, %s31
      %p37 = scmp.eq.s32.totalorder %s18, 0
      %p38 = por %p36, %p37
      %p39 = scmp.ne.s32.totalorder %s28, %s31
      %p40 = scmp.eq.s32.totalorder %s23, 1
      %p41 = por %p39, %p40
      %p42 = scmp.ne.s32.totalorder %s31, %s32
      %p43 = scmp.eq.s32.totalorder %s23, 0
      %p44 = por %p42, %p43
      %p45 = scmp.ne.s32.totalorder %s31, %s32
      %p46 = scmp.eq.s32.totalorder %s24, 1
      %p47 = por %p45, %p46
      %p49 = scmp.ne.s32.totalorder %s32, %s48
      %p50 = scmp.eq.s32.totalorder %s24, 0
      %p51 = por %p49, %p50
      %s53 = sadd.s32 %s52, 1
      %p56 = scmp.eq.s32.totalorder %s18, 1
      %p57 = scmp.ne.s32.totalorder %s52, %s54
      %p58 = scmp.eq.s32.totalorder %s18, 0
      %p59 = por %p57, %p58
      %p60 = scmp.ne.s32.totalorder %s52, %s54
      %p61 = scmp.eq.s32.totalorder %s23, 1
      %p62 = por %p60, %p61
      %p63 = scmp.ne.s32.totalorder %s54, %s55
      %p64 = scmp.eq.s32.totalorder %s23, 0
      %p65 = por %p63, %p64
      %p66 = scmp.ne.s32.totalorder %s54, %s55
      %p67 = scmp.eq.s32.totalorder %s24, 1
      %p68 = por %p66, %p67
      %p70 = scmp.ne.s32.totalorder %s55, %s69
      %p71 = scmp.eq.s32.totalorder %s24, 0
      %p72 = por %p70, %p71
      %s74 = sadd.s32 %s73, 1
      %p77 = scmp.eq.s32.totalorder %s18, 1
      %p78 = scmp.ne.s32.totalorder %s73, %s75
      %p79 = scmp.eq.s32.totalorder %s18, 0
      %p80 = por %p78, %p79
      %p81 = scmp.ne.s32.totalorder %s73, %s75
      %p82 = scmp.eq.s32.totalorder %s23, 1
      %p83 = por %p81, %p82
      %p84 = scmp.ne.s32.totalorder %s75, %s76
      %p85 = scmp.eq.s32.totalorder %s23, 0
      %p86 = por %p84, %p85
      %p87 = scmp.ne.s32.totalorder %s75, %s76
      %p88 = scmp.eq.s32.totalorder %s24, 1
      %p89 = por %p87, %p88
      %p91 = scmp.ne.s32.totalorder %s76, %s90
      %p92 = scmp.eq.s32.totalorder %s24, 0
      %p93 = por %p91, %p92
      %s95 = sadd.s32 %s94, 1
      %p98 = scmp.eq.s32.totalorder %s18, 1
      %p99 = scmp.ne.s32.totalorder %s94, %s96
      %p100 = scmp.eq.s32.totalorder %s18, 0
      %p101 = por %p99, %p100
      %p102 = scmp.ne.s32.totalorder %s94, %s96
      %p103 = scmp.eq.s32.totalorder %s23, 1
      %p104 = por %p102, %p103
      %p105 = scmp.ne.s32.totalorder %s96, %s97
      %p106 = scmp.eq.s32.totalorder %s23, 0
      %p107 = por %p105, %p106
      %p108 = scmp.ne.s32.totalorder %s96, %s97
      %p109 = scmp.eq.s32.totalorder %s24, 1
      %p110 = por %p108, %p109
      %p112 = scmp.ne.s32.totalorder %s97, %s111
      %p113 = scmp.eq.s32.totalorder %s24, 0
      %p114 = por %p112, %p113
      %s116 = sadd.s32 %s115, 1
      %p119 = scmp.eq.s32.totalorder %s18, 1
      %p120 = scmp.ne.s32.totalorder %s115, %s117
      %p121 = scmp.eq.s32.totalorder %s18, 0
      %p122 = por %p120, %p121
      %p123 = scmp.ne.s32.totalorder %s115, %s117
      %p124 = scmp.eq.s32.totalorder %s23, 1
      %p125 = por %p123, %p124
      %p126 = scmp.ne.s32.totalorder %s117, %s118
      %p127 = scmp.eq.s32.totalorder %s23, 0
      %p128 = por %p126, %p127
      %p129 = scmp.ne.s32.totalorder %s117, %s118
      %p130 = scmp.eq.s32.totalorder %s24, 1
      %p131 = por %p129, %p130
      %p133 = scmp.ne.s32.totalorder %s118, %s132
      %p134 = scmp.eq.s32.totalorder %s24, 0
      %p135 = por %p133, %p134
      %s137 = sadd.s32 %s136, 1
      %p140 = scmp.eq.s32.totalorder %s18, 1
      %p141 = scmp.ne.s32.totalorder %s136, %s138
      %p142 = scmp.eq.s32.totalorder %s18, 0
      %p143 = por %p141, %p142
      %p144 = scmp.ne.s32.totalorder %s136, %s138
      %p145 = scmp.eq.s32.totalorder %s23, 1
      %p146 = por %p144, %p145
      %p147 = scmp.ne.s32.totalorder %s138, %s139
      %p148 = scmp.eq.s32.totalorder %s23, 0
      %p149 = por %p147, %p148
      %p150 = scmp.ne.s32.totalorder %s138, %s139
      %p151 = scmp.eq.s32.totalorder %s24, 1
      %p152 = por %p150, %p151
      %p154 = scmp.ne.s32.totalorder %s139, %s153
      %p155 = scmp.eq.s32.totalorder %s24, 0
      %p156 = por %p154, %p155
      %s158 = sadd.s32 %s157, 1
      %p161 = scmp.eq.s32.totalorder %s18, 1
      %p162 = scmp.ne.s32.totalorder %s157, %s159
      %p163 = scmp.eq.s32.totalorder %s18, 0
      %p164 = por %p162, %p163
      %p165 = scmp.ne.s32.totalorder %s157, %s159
      %p166 = scmp.eq.s32.totalorder %s23, 1
      %p167 = por %p165, %p166
      %p168 = scmp.ne.s32.totalorder %s159, %s160
      %p169 = scmp.eq.s32.totalorder %s23, 0
      %p170 = por %p168, %p169
      %p171 = scmp.ne.s32.totalorder %s159, %s160
      %p172 = scmp.eq.s32.totalorder %s24, 1
      %p173 = por %p171, %p172
      %p175 = scmp.ne.s32.totalorder %s160, %s174
      %p176 = scmp.eq.s32.totalorder %s24, 0
      %p177 = por %p175, %p176
      %s179 = sadd.s32 %s178, 1
      %p182 = scmp.eq.s32.totalorder %s18, 1
      %p183 = scmp.ne.s32.totalorder %s178, %s180
      %p184 = scmp.eq.s32.totalorder %s18, 0
      %p185 = por %p183, %p184
      %p186 = scmp.ne.s32.totalorder %s178, %s180
      %p187 = scmp.eq.s32.totalorder %s23, 1
      %p188 = por %p186, %p187
      %p189 = scmp.ne.s32.totalorder %s180, %s181
      %p190 = scmp.eq.s32.totalorder %s23, 0
      %p191 = por %p189, %p190
      %p192 = scmp.ne.s32.totalorder %s180, %s181
      %p193 = scmp.eq.s32.totalorder %s24, 1
      %p194 = por %p192, %p193
      %p196 = scmp.ne.s32.totalorder %s181, %s195
      %p197 = scmp.eq.s32.totalorder %s24, 0
      %p198 = por %p196, %p197
      %s200 = sadd.s32 %s199, 1
      %p203 = scmp.eq.s32.totalorder %s18, 1
      %p204 = scmp.ne.s32.totalorder %s199, %s201
      %p205 = scmp.eq.s32.totalorder %s18, 0
      %p206 = por %p204, %p205
      %p207 = scmp.ne.s32.totalorder %s199, %s201
      %p208 = scmp.eq.s32.totalorder %s23, 1
      %p209 = por %p207, %p208
      %p210 = scmp.ne.s32.totalorder %s201, %s202
      %p211 = scmp.eq.s32.totalorder %s23, 0
      %p212 = por %p210, %p211
      %p213 = scmp.ne.s32.totalorder %s201, %s202
      %p214 = scmp.eq.s32.totalorder %s24, 1
      %p215 = por %p213, %p214
      %p217 = scmp.ne.s32.totalorder %s202, %s216
      %p218 = scmp.eq.s32.totalorder %s24, 0
      %p219 = por %p217, %p218
      %s220 = ssub.s32 %s18, %s25
      %p221 = scmp.eq.s32.totalorder %s220, 0
      %s223 = sadd.s32 %s222, 1
      %s224 = scalar_select %p221, %s222, %s223
      %p227 = pneg %p221
      %p228 = scmp.eq.s32.totalorder %s18, 1
      %p229 = por %p227, %p228
      %p230 = scmp.ne.s32.totalorder %s222, %s225
      %p231 = scmp.eq.s32.totalorder %s18, 0
      %p232 = por %p230, %p231
      %p233 = scmp.ne.s32.totalorder %s222, %s225
      %p234 = scmp.eq.s32.totalorder %s23, 1
      %p235 = por %p233, %p234
      %p236 = scmp.ne.s32.totalorder %s225, %s226
      %p237 = scmp.eq.s32.totalorder %s23, 0
      %p238 = por %p236, %p237
      %p239 = scmp.ne.s32.totalorder %s225, %s226
      %p240 = scmp.eq.s32.totalorder %s24, 1
      %p241 = por %p239, %p240
      %p243 = scmp.ne.s32.totalorder %s226, %s242
      %p244 = scmp.eq.s32.totalorder %s24, 0
      %p245 = por %p243, %p244
      %p246 = scmp.le.s32.totalorder 1, %s18
      %p247 = scmp.lt.s32.totalorder %s18, 3
      %p248 = pnand %p246, %p247
      %p249 = pneg %p248
      // Predicated region
      $region9: #{tpu_custom_call.1} parent=5 // pred_check
        _
      $region10: #{tpu_custom_call.1} parent=5 // pred_check_branch
        %251 = sbr.rel (%p248) target = $region12
      $region11: #{tpu_custom_call.1} parent=5 // pred_region
        %s252 = ssub.s32 %s18, 1
        // Predicated region
        $region13: #{tpu_custom_call.1} parent=11 // pred_check
          %p253 = pneg %p65
        $region14: #{tpu_custom_call.1} parent=11 // pred_check_branch
          %255 = sbr.rel (%p253) target = $region16
        $region15: #{tpu_custom_call.1} parent=11 // pred_region
          _
        $region16: #{tpu_custom_call.1} parent=11 // pred_fallthru
          _
        // Predicated region
        $region17: #{tpu_custom_call.1} parent=11 // pred_check
          %p256 = pneg %p86
        $region18: #{tpu_custom_call.1} parent=11 // pred_check_branch
          %258 = sbr.rel (%p256) target = $region20
        $region19: #{tpu_custom_call.1} parent=11 // pred_region
          _
        $region20: #{tpu_custom_call.1} parent=11 // pred_fallthru
          _
        // Predicated region
        $region21: #{tpu_custom_call.1} parent=11 // pred_check
          %p259 = pneg %p107
        $region22: #{tpu_custom_call.1} parent=11 // pred_check_branch
          %261 = sbr.rel (%p259) target = $region24
        $region23: #{tpu_custom_call.1} parent=11 // pred_region
          _
        $region24: #{tpu_custom_call.1} parent=11 // pred_fallthru
          _
        // Predicated region
        $region25: #{tpu_custom_call.1} parent=11 // pred_check
          %p262 = pneg %p128
        $region26: #{tpu_custom_call.1} parent=11 // pred_check_branch
          %264 = sbr.rel (%p262) target = $region28
        $region27: #{tpu_custom_call.1} parent=11 // pred_region
          _
        $region28: #{tpu_custom_call.1} parent=11 // pred_fallthru
          _
        // Predicated region
        $region29: #{tpu_custom_call.1} parent=11 // pred_check
          %p265 = pneg %p149
        $region30: #{tpu_custom_call.1} parent=11 // pred_check_branch
          %267 = sbr.rel (%p265) target = $region32
        $region31: #{tpu_custom_call.1} parent=11 // pred_region
          _
        $region32: #{tpu_custom_call.1} parent=11 // pred_fallthru
          _
        // Predicated region
        $region33: #{tpu_custom_call.1} parent=11 // pred_check
          %p268 = pneg %p170
        $region34: #{tpu_custom_call.1} parent=11 // pred_check_branch
          %270 = sbr.rel (%p268) target = $region36
        $region35: #{tpu_custom_call.1} parent=11 // pred_region
          _
        $region36: #{tpu_custom_call.1} parent=11 // pred_fallthru
          _
        // Predicated region
        $region37: #{tpu_custom_call.1} parent=11 // pred_check
          %p271 = pneg %p191
        $region38: #{tpu_custom_call.1} parent=11 // pred_check_branch
          %273 = sbr.rel (%p271) target = $region40
        $region39: #{tpu_custom_call.1} parent=11 // pred_region
          _
        $region40: #{tpu_custom_call.1} parent=11 // pred_fallthru
          _
        // Predicated region
        $region41: #{tpu_custom_call.1} parent=11 // pred_check
          %p274 = pneg %p212
        $region42: #{tpu_custom_call.1} parent=11 // pred_check_branch
          %276 = sbr.rel (%p274) target = $region44
        $region43: #{tpu_custom_call.1} parent=11 // pred_region
          _
        $region44: #{tpu_custom_call.1} parent=11 // pred_fallthru
          _
      $region12: #{tpu_custom_call.1} parent=5 // pred_fallthru
        _
      %p277 = scmp.lt.s32.totalorder %s18, 2
      // Predicated region
      $region45: #{tpu_custom_call.1} parent=5 // pred_check
        %p278 = pneg %p277
      $region46: #{tpu_custom_call.1} parent=5 // pred_check_branch
        %280 = sbr.rel (%p278) target = $region48
      $region47: #{tpu_custom_call.1} parent=5 // pred_region
        // Predicated region
        $region49: #{tpu_custom_call.1} parent=47 // pred_check
          %p281 = pneg %p38
        $region50: #{tpu_custom_call.1} parent=47 // pred_check_branch
          %283 = sbr.rel (%p281) target = $region52
        $region51: #{tpu_custom_call.1} parent=47 // pred_region
          %p284 = scmp.lt.s32.totalorder %s18, 1
          %s285 = scalar_select %p284, %s18, 1
          %s286 = smul.addr %s285, 8
          %s287 = smul.addr %s286, 4
          %s288 = scalar_lea.vmem %s0, %s287
        $region52: #{tpu_custom_call.1} parent=47 // pred_fallthru
          _
      $region48: #{tpu_custom_call.1} parent=5 // pred_fallthru
        _
      %p289 = scmp.le.s32.totalorder 1, %s18
      %p290 = scmp.lt.s32.totalorder %s18, 3
      %p291 = pnand %p289, %p290
      %p292 = pneg %p291
      // Predicated region
      $region53: #{tpu_custom_call.1} parent=5 // pred_check
        _
      $region54: #{tpu_custom_call.1} parent=5 // pred_check_branch
        %294 = sbr.rel (%p291) target = $region56
      $region55: #{tpu_custom_call.1} parent=5 // pred_region
        %s295 = ssub.s32 %s18, 1
        %p296 = scmp.lt.s32.totalorder %s23, 1
        %s297 = scalar_select %p296, %s23, 1
        %s298 = smul.addr %s297, 8
        %s299 = smul.addr %s298, 4
        %s300 = scalar_lea.vmem %s0, %s299
        %p301 = pneg %p44
        %p302 = pneg %p41
        %p303 = pneg %p65
        %p304 = pneg %p62
        %p305 = pneg %p86
        %p306 = pneg %p83
        %p307 = pneg %p107
        %p308 = pneg %p104
        %p309 = pneg %p128
        %p310 = pneg %p125
        %p311 = pneg %p149
        %p312 = pneg %p146
        %p313 = pneg %p170
        %p314 = pneg %p167
        %p315 = pneg %p191
        %p316 = pneg %p188
        %p317 = pneg %p212
        %p318 = pneg %p209
        %p319 = pneg %p238
        %p320 = pneg %p235
        %s321 = sand.u32 %s225, 1
        %s322 = scalar_lea.sflag [#allocation3], %s321
        %s323 = sand.u32 %s225, 1
        %s324 = smul.addr %s323, 64
        %s325 = scalar_lea.vmem [#allocation2], %s324
        %p326 = scmp.lt.s32.totalorder %s23, 1
        %s327 = scalar_select %p326, %s23, 1
        %s328 = smul.addr %s327, 8
        %s329 = smul.addr %s328, 4
        %s330 = scalar_lea.vmem %s0, %s329
        %v332 = vld [vmem:[%s330] sm:$0xff]
        %v333 = vld [vmem:[%s330 + $0x8] sm:$0xff]
        %v334 = vld [vmem:[%s330 + $0x10] sm:$0xff]
        %v335 = vld [vmem:[%s330 + $0x18] sm:$0xff]
        %v336 = vld [vmem:[%s1] sm:$0xf]
        %v337 = vld [vmem:[%s2] sm:$0xff]
        %339 = vset.pattern.permute.xlu0 0
        %340 = vperm.xlu0 %339, %v337
        %v341 = vpop.permute.xlu0 %340
        %v347 = vunpack.c.l.b16 %v332
        %v348 = vunpack.c.h.b16 %v332
        %v349 = vunpack.c.l.b16 %v333
        %v350 = vunpack.c.h.b16 %v333
        %v351 = vunpack.c.l.b16 %v334
        %v352 = vunpack.c.h.b16 %v334
        %v353 = vunpack.c.l.b16 %v335
        %v354 = vunpack.c.h.b16 %v335
        %v355 = vpack.c.b16 %v349, %v347
        %v356 = vpack.c.b16 %v350, %v348
        %v357 = vpack.c.b16 %v353, %v351
        %v358 = vpack.c.b16 %v354, %v352
        %vm363 = vcmask 261120
        %v365 = vsel %vm363, %v336, 0
        %367 = vmatprep.subr.bf16.mxu0 %v356
        %368 = vmatpush1.bf16.msra.mxu0 %v355
        %369 = vmatprep.subr.bf16.mxu0 %v358
        %370 = vmatpush1.bf16.msra.mxu0 %v357
        %371 = vmatprep.subr.bf16.mxu0 0
        %372 = vmatpush1.bf16.msra.mxu0 0
        %373 = vmatprep.subr.bf16.mxu0 0
        %374 = vmatpush1.bf16.msra.mxu0 0
        %375 = vmatprep.subr.bf16.mxu0 0
        %376 = vmatpush1.bf16.msra.mxu0 0
        %377 = vmatprep.subr.bf16.mxu0 0
        %378 = vmatpush1.bf16.msra.mxu0 0
        %379 = vmatprep.subr.bf16.mxu0 0
        %380 = vmatpush1.bf16.msra.mxu0 0
        %381 = vmatprep.subr.bf16.mxu0 0
        %382 = vmatpush1.bf16.msra.mxu0 0
        %383 = vmatprep.subr.bf16.mxu0 0
        %384 = vmatpush1.bf16.msra.mxu0 0
        %385 = vmatprep.subr.bf16.mxu0 0
        %386 = vmatpush1.bf16.msra.mxu0 0
        %387 = vmatprep.subr.bf16.mxu0 0
        %388 = vmatpush1.bf16.msra.mxu0 0
        %389 = vmatprep.subr.bf16.mxu0 0
        %390 = vmatpush1.bf16.msra.mxu0 0
        %391 = vmatprep.subr.bf16.mxu0 0
        %392 = vmatpush1.bf16.msra.mxu0 0
        %393 = vmatprep.subr.bf16.mxu0 0
        %394 = vmatpush1.bf16.msra.mxu0 0
        %395 = vmatprep.subr.bf16.mxu0 0
        %396 = vmatpush1.bf16.msra.mxu0 0
        %397 = vmatprep.subr.bf16.mxu0 0
        %398 = vmatpush1.bf16.msra.mxu0 0
        %399 = vmatprep.mubr.bf16.mxu0 0
        %400 = vmatmul.mubr.bf16.gmra.mrb[0].mxu0 %v365
        %v401 = vpop.f32.mrb[0].mxu0
        %v402 = vadd.f32 %v341, %v401
        %v403 = vpop.f32.mrb[0].mxu0
        %v404 = vadd.f32 %v341, %v403
        %v405 = vpop.f32.mrb[0].mxu0
        %v406 = vpop.f32.mrb[0].mxu0
        %407 = vdwg.mxu0
        %v408 = vmax.f32 %v402, 0.0
        %v409 = vmax.f32 %v404, 0.0
        %v410 = vld [vmem:[%s7] sm:$0x3]
        %v411 = vld [vmem:[%s8] sm:$0x3]
        %v413 = vlaneseq
        %v414 = vshrl.u32 %v413, 7
        %v415 = vsub.s32 0, %v414
        %v416 = vrot.slane %v410, %v415
        %v417 = vlaneseq
        %v418 = vshrl.u32 %v417, 7
        %v419 = vsub.s32 1, %v418
        %v420 = vrot.slane %v410, %v419
        %421 = vrot.lane.b32.xlu0 %v416, 111
        %v422 = vpop.permute.xlu0 %421
        %423 = vrot.lane.b32.xlu0 %v420, 111
        %v424 = vpop.permute.xlu0 %423
        %vm425 = vcmask 908288
        %v426 = vsel %vm425, %v422, %v424
        %v430 = vmul.f32 %v422, 0.0
        %v431 = vmul.f32 %v408, %v426
        %v432 = vmul.f32 %v409, %v424
        %v434 = vlaneseq
        %v435 = vshrl.u32 %v434, 7
        %v436 = vsub.s32 0, %v435
        %v437 = vrot.slane %v411, %v436
        %v438 = vlaneseq
        %v439 = vshrl.u32 %v438, 7
        %v440 = vsub.s32 1, %v439
        %v441 = vrot.slane %v411, %v440
        %442 = vrot.lane.b32.xlu0 %v437, 113
        %v443 = vpop.permute.xlu0 %442
        %444 = vrot.lane.b32.xlu0 %v441, 113
        %v445 = vpop.permute.xlu0 %444
        %vm446 = vcmask 924672
        %v447 = vsel %vm446, %v443, %v445
        %v451 = vmul.f32 %v443, 0.0
        %v452 = vmul.f32 %v408, %v447
        %v453 = vmul.f32 %v409, %v445
        %454 = vrot.lane.b32.xlu0 %v416, 127
        %v455 = vpop.permute.xlu0 %454
        %456 = vrot.lane.b32.xlu0 %v420, 127
        %v457 = vpop.permute.xlu0 %456
        %vm458 = vcmask 1039360
        %v459 = vsel %vm458, %v455, %v457
        %v463 = vmul.f32 %v455, 0.0
        %v464 = vmul.f32 %v408, %v459
        %v465 = vmul.f32 %v409, %v457
        %466 = vrot.lane.b32.xlu0 %v437, 1
        %v467 = vpop.permute.xlu0 %466
        %468 = vrot.lane.b32.xlu0 %v441, 1
        %v469 = vpop.permute.xlu0 %468
        %vm470 = vcmask 7168
        %v471 = vsel %vm470, %v467, %v469
        %v475 = vmul.f32 %v408, %v467
        %v476 = vmul.f32 %v409, %v471
        %v477 = vmul.f32 %v469, 0.0
        %478 = vrot.lane.b32.xlu0 %v416, 15
        %v479 = vpop.permute.xlu0 %478
        %480 = vrot.lane.b32.xlu0 %v420, 15
        %v481 = vpop.permute.xlu0 %480
        %vm482 = vcmask 121856
        %v483 = vsel %vm482, %v479, %v481
        %v487 = vmul.f32 %v408, %v479
        %v488 = vmul.f32 %v409, %v483
        %v489 = vmul.f32 %v481, 0.0
        %490 = vrot.lane.b32.xlu0 %v437, 17
        %v491 = vpop.permute.xlu0 %490
        %492 = vrot.lane.b32.xlu0 %v441, 17
        %v493 = vpop.permute.xlu0 %492
        %vm494 = vcmask 138240
        %v495 = vsel %vm494, %v491, %v493
        %v499 = vmul.f32 %v408, %v491
        %v500 = vmul.f32 %v409, %v495
        %v501 = vmul.f32 %v493, 0.0
        %505 = vrot.lane.b32.xlu0 0.0, 127
        %v506 = vpop.permute.xlu0 %505
        %507 = vrot.lane.b32.xlu0 %v408, 127
        %v508 = vpop.permute.xlu0 %507
        %509 = vrot.lane.b32.xlu0 %v409, 127
        %v510 = vpop.permute.xlu0 %509
        %v511 = vsel %vm458, %v506, %v508
        %v512 = vsel %vm458, %v508, %v510
        %519 = vrot.lane.b32.xlu0 %v451, 126
        %v520 = vpop.permute.xlu0 %519
        %521 = vrot.lane.b32.xlu0 %v452, 126
        %v522 = vpop.permute.xlu0 %521
        %523 = vrot.lane.b32.xlu0 %v453, 126
        %v524 = vpop.permute.xlu0 %523
        %vm525 = vcmask 1031168
        %v526 = vsel %vm525, %v520, %v522
        %v527 = vsel %vm525, %v522, %v524
        %534 = vrot.lane.b32.xlu0 %v463, 112
        %v535 = vpop.permute.xlu0 %534
        %536 = vrot.lane.b32.xlu0 %v464, 112
        %v537 = vpop.permute.xlu0 %536
        %538 = vrot.lane.b32.xlu0 %v465, 112
        %v539 = vpop.permute.xlu0 %538
        %vm540 = vcmask 916480
        %v541 = vsel %vm540, %v535, %v537
        %v542 = vsel %vm540, %v537, %v539
        %546 = vrot.lane.b32.xlu0 %v408, 111
        %v547 = vpop.permute.xlu0 %546
        %548 = vrot.lane.b32.xlu0 %v409, 111
        %v549 = vpop.permute.xlu0 %548
        %v550 = vsel %vm425, %v547, %v549
        %557 = vrot.lane.b32.xlu0 %v475, 110
        %v558 = vpop.permute.xlu0 %557
        %559 = vrot.lane.b32.xlu0 %v476, 110
        %v560 = vpop.permute.xlu0 %559
        %561 = vrot.lane.b32.xlu0 %v477, 110
        %v562 = vpop.permute.xlu0 %561
        %vm563 = vcmask 900096
        %v564 = vsel %vm563, %v558, %v560
        %v565 = vsel %vm563, %v560, %v562
        %572 = vrot.lane.b32.xlu0 %v487, 96
        %v573 = vpop.permute.xlu0 %572
        %574 = vrot.lane.b32.xlu0 %v488, 96
        %v575 = vpop.permute.xlu0 %574
        %576 = vrot.lane.b32.xlu0 %v489, 96
        %v577 = vpop.permute.xlu0 %576
        %vm578 = vcmask 785408
        %v579 = vsel %vm578, %v573, %v575
        %v580 = vsel %vm578, %v575, %v577
        %584 = vrot.lane.b32.xlu0 %v408, 95
        %v585 = vpop.permute.xlu0 %584
        %586 = vrot.lane.b32.xlu0 %v409, 95
        %v587 = vpop.permute.xlu0 %586
        %588 = vrot.lane.b32.xlu0 0.0, 95
        %v589 = vpop.permute.xlu0 %588
        %vm590 = vcmask 777216
        %v591 = vsel %vm590, %v585, %v587
        %v592 = vsel %vm590, %v587, %v589
        %599 = vrot.lane.b32.xlu0 %v499, 94
        %v600 = vpop.permute.xlu0 %599
        %601 = vrot.lane.b32.xlu0 %v500, 94
        %v602 = vpop.permute.xlu0 %601
        %603 = vrot.lane.b32.xlu0 %v501, 94
        %v604 = vpop.permute.xlu0 %603
        %vm605 = vcmask 769024
        %v606 = vsel %vm605, %v600, %v602
        %v607 = vsel %vm605, %v602, %v604
        %v611 = vpack.c.bf16 %v511, %v430
        %v612 = vpack.c.bf16 %v512, %v431
        %v613 = vpack.c.bf16 %v510, %v432
        %v614 = vpack.c.bf16 %v541, %v526
        %v615 = vpack.c.bf16 %v542, %v527
        %v616 = vpack.c.bf16 %v539, %v524
        %v617 = vpack.c.bf16 %v558, %v547
        %v618 = vpack.c.bf16 %v564, %v550
        %v619 = vpack.c.bf16 %v565, %v549
        %v620 = vpack.c.bf16 %v585, %v573
        %v621 = vpack.c.bf16 %v591, %v579
        %v622 = vpack.c.bf16 %v592, %v580
        %v623 = vpack.c.bf16 %v600, %v600
        %v624 = vpack.c.bf16 %v606, %v606
        %v625 = vpack.c.bf16 %v607, %v607
        %v626 = vld [vmem:[%s3] sm:$0xf]
        %v627 = vld [vmem:[%s4] sm:$0xff]
        %629 = vset.pattern.permute.xlu0 0
        %630 = vperm.xlu0 %629, %v627
        %v631 = vpop.permute.xlu0 %630
        %648 = vrot.lane.b32.xlu0 %v611, 17
        %v649 = vpop.permute.xlu0 %648
        %650 = vrot.lane.b32.xlu0 %v612, 17
        %v651 = vpop.permute.xlu0 %650
        %652 = vrot.lane.b32.xlu0 %v613, 17
        %v653 = vpop.permute.xlu0 %652
        %654 = vrot.lane.b32.xlu0 %v614, 17
        %v655 = vpop.permute.xlu0 %654
        %656 = vrot.lane.b32.xlu0 %v615, 17
        %v657 = vpop.permute.xlu0 %656
        %658 = vrot.lane.b32.xlu0 %v616, 17
        %v659 = vpop.permute.xlu0 %658
        %660 = vrot.lane.b32.xlu0 %v617, 17
        %v661 = vpop.permute.xlu0 %660
        %662 = vrot.lane.b32.xlu0 %v618, 17
        %v663 = vpop.permute.xlu0 %662
        %664 = vrot.lane.b32.xlu0 %v619, 17
        %v665 = vpop.permute.xlu0 %664
        %666 = vrot.lane.b32.xlu0 %v620, 17
        %v667 = vpop.permute.xlu0 %666
        %668 = vrot.lane.b32.xlu0 %v621, 17
        %v669 = vpop.permute.xlu0 %668
        %670 = vrot.lane.b32.xlu0 %v622, 17
        %v671 = vpop.permute.xlu0 %670
        %672 = vrot.lane.b32.xlu0 %v623, 17
        %v673 = vpop.permute.xlu0 %672
        %674 = vrot.lane.b32.xlu0 %v624, 17
        %v675 = vpop.permute.xlu0 %674
        %676 = vrot.lane.b32.xlu0 %v625, 17
        %v677 = vpop.permute.xlu0 %676
        %vm678 = vcmask 138240
        %v679 = vsel %vm678, %v649, %v651
        %v680 = vsel %vm678, %v651, %v653
        %v681 = vsel %vm678, %v655, %v657
        %v682 = vsel %vm678, %v657, %v659
        %v683 = vsel %vm678, %v661, %v663
        %v684 = vsel %vm678, %v663, %v665
        %v685 = vsel %vm678, %v667, %v669
        %v686 = vsel %vm678, %v669, %v671
        %v687 = vsel %vm678, %v673, %v675
        %v688 = vsel %vm678, %v675, %v677
        %vm697 = vcmask 588800
        %v699 = vsel %vm697, %v626, 0
        %vm701 = vcmask 1043456
        %v703 = vsel %vm701, %v687, 0
        %v706 = vsel %vm701, %v688, 0
        %708 = vmatprep.subr.bf16.mxu0 %v680
        %709 = vmatpush1.bf16.msra.mxu0 %v679
        %710 = vmatprep.subr.bf16.mxu0 %v682
        %711 = vmatpush1.bf16.msra.mxu0 %v681
        %712 = vmatprep.subr.bf16.mxu0 %v684
        %713 = vmatpush1.bf16.msra.mxu0 %v683
        %714 = vmatprep.subr.bf16.mxu0 %v686
        %715 = vmatpush1.bf16.msra.mxu0 %v685
        %716 = vmatprep.subr.bf16.mxu0 %v706
        %717 = vmatpush1.bf16.msra.mxu0 %v703
        %718 = vmatprep.subr.bf16.mxu0 0
        %719 = vmatpush1.bf16.msra.mxu0 0
        %720 = vmatprep.subr.bf16.mxu0 0
        %721 = vmatpush1.bf16.msra.mxu0 0
        %722 = vmatprep.subr.bf16.mxu0 0
        %723 = vmatpush1.bf16.msra.mxu0 0
        %724 = vmatprep.subr.bf16.mxu0 0
        %725 = vmatpush1.bf16.msra.mxu0 0
        %726 = vmatprep.subr.bf16.mxu0 0
        %727 = vmatpush1.bf16.msra.mxu0 0
        %728 = vmatprep.subr.bf16.mxu0 0
        %729 = vmatpush1.bf16.msra.mxu0 0
        %730 = vmatprep.subr.bf16.mxu0 0
        %731 = vmatpush1.bf16.msra.mxu0 0
        %732 = vmatprep.subr.bf16.mxu0 0
        %733 = vmatpush1.bf16.msra.mxu0 0
        %734 = vmatprep.subr.bf16.mxu0 0
        %735 = vmatpush1.bf16.msra.mxu0 0
        %736 = vmatprep.subr.bf16.mxu0 0
        %737 = vmatpush1.bf16.msra.mxu0 0
        %738 = vmatprep.subr.bf16.mxu0 0
        %739 = vmatpush1.bf16.msra.mxu0 0
        %740 = vmatprep.mubr.bf16.mxu0 0
        %741 = vmatmul.mubr.bf16.gmra.mrb[0].mxu0 %v699
        %v742 = vpop.f32.mrb[0].mxu0
        %v743 = vadd.f32 %v631, %v742
        %v744 = vpop.f32.mrb[0].mxu0
        %v745 = vadd.f32 %v631, %v744
        %v746 = vpop.f32.mrb[0].mxu0
        %v747 = vpop.f32.mrb[0].mxu0
        %748 = vdwg.mxu0
        %v749 = vmax.f32 %v743, 0.0
        %v750 = vmax.f32 %v745, 0.0
        %v751 = vld [vmem:[%s5] sm:$0xf]
        %v752 = vld [vmem:[%s5 + $0x4] sm:$0xf]
        %v753 = vld [vmem:[%s5 + $0x8] sm:$0xf]
        %v754 = vld [vmem:[%s5 + $0xc] sm:$0xf]
        %v755 = vpack.c.bf16 %v749, %v749
        %v756 = vpack.c.bf16 %v750, %v750
        %v757 = vld [vmem:[%s6] sm:$0xff]
        %v758 = vld [vmem:[%s6 + $0x8] sm:$0xff]
        %v759 = vld [vmem:[%s6 + $0x10] sm:$0xff]
        %v760 = vld [vmem:[%s6 + $0x18] sm:$0xff]
        %762 = vset.pattern.permute.xlu0 0
        %763 = vperm.xlu0 %762, %v757
        %v764 = vpop.permute.xlu0 %763
        %767 = vset.pattern.permute.xlu0 0
        %768 = vperm.xlu0 %767, %v758
        %v769 = vpop.permute.xlu0 %768
        %772 = vset.pattern.permute.xlu0 0
        %773 = vperm.xlu0 %772, %v759
        %v774 = vpop.permute.xlu0 %773
        %777 = vset.pattern.permute.xlu0 0
        %778 = vperm.xlu0 %777, %v760
        %v779 = vpop.permute.xlu0 %778
        %v785 = vunpack.c.l.b16 %v751
        %v786 = vunpack.c.l.b16 %v752
        %v787 = vunpack.c.l.b16 %v753
        %v788 = vunpack.c.l.b16 %v754
        %v789 = vpack.c.b16 %v786, %v785
        %v790 = vpack.c.b16 %v788, %v787
        %vm791 = vcmask 64512
        %v793 = vsel %vm791, %v789, 0
        %v796 = vsel %vm791, %v790, 0
        %v799 = vsel %vm701, %v755, 0
        %v802 = vsel %vm701, %v756, 0
        %804 = vmatprep.subr.bf16.mxu0 %v802
        %805 = vmatpush1.bf16.msra.mxu0 %v799
        %806 = vmatprep.subr.bf16.mxu0 0
        %807 = vmatpush1.bf16.msra.mxu0 0
        %808 = vmatprep.subr.bf16.mxu0 0
        %809 = vmatpush1.bf16.msra.mxu0 0
        %810 = vmatprep.subr.bf16.mxu0 0
        %811 = vmatpush1.bf16.msra.mxu0 0
        %812 = vmatprep.subr.bf16.mxu0 0
        %813 = vmatpush1.bf16.msra.mxu0 0
        %814 = vmatprep.subr.bf16.mxu0 0
        %815 = vmatpush1.bf16.msra.mxu0 0
        %816 = vmatprep.subr.bf16.mxu0 0
        %817 = vmatpush1.bf16.msra.mxu0 0
        %818 = vmatprep.subr.bf16.mxu0 0
        %819 = vmatpush1.bf16.msra.mxu0 0
        %820 = vmatprep.subr.bf16.mxu0 0
        %821 = vmatpush1.bf16.msra.mxu0 0
        %822 = vmatprep.subr.bf16.mxu0 0
        %823 = vmatpush1.bf16.msra.mxu0 0
        %824 = vmatprep.subr.bf16.mxu0 0
        %825 = vmatpush1.bf16.msra.mxu0 0
        %826 = vmatprep.subr.bf16.mxu0 0
        %827 = vmatpush1.bf16.msra.mxu0 0
        %828 = vmatprep.subr.bf16.mxu0 0
        %829 = vmatpush1.bf16.msra.mxu0 0
        %830 = vmatprep.subr.bf16.mxu0 0
        %831 = vmatpush1.bf16.msra.mxu0 0
        %832 = vmatprep.subr.bf16.mxu0 0
        %833 = vmatpush1.bf16.msra.mxu0 0
        %834 = vmatprep.subr.bf16.mxu0 0
        %835 = vmatpush1.bf16.msra.mxu0 0
        %836 = vmatprep.mubr.bf16.mxu0 0
        %837 = vmatmul.mubr.bf16.gmra.mrb[0].mxu0 %v793
        %v838 = vpop.f32.mrb[0].mxu0
        %v839 = vadd.f32 %v764, %v838
        %v840 = vpop.f32.mrb[0].mxu0
        %v841 = vadd.f32 %v764, %v840
        %v842 = vpop.f32.mrb[0].mxu0
        %v843 = vadd.f32 %v769, %v842
        %v844 = vpop.f32.mrb[0].mxu0
        %v845 = vadd.f32 %v769, %v844
        %846 = vmatprep.mubr.bf16.mxu0 0
        %847 = vmatmul.mubr.bf16.gmra.mrb[0].mxu0 %v796
        %v848 = vpop.f32.mrb[0].mxu0
        %v849 = vadd.f32 %v774, %v848
        %v850 = vpop.f32.mrb[0].mxu0
        %v851 = vadd.f32 %v774, %v850
        %v852 = vpop.f32.mrb[0].mxu0
        %v853 = vadd.f32 %v779, %v852
        %v854 = vpop.f32.mrb[0].mxu0
        %v855 = vadd.f32 %v779, %v854
        %856 = vdwg.mxu0
        %v857 = vunpack.c.l.bf16 %v332
        %v858 = vunpack.c.h.bf16 %v332
        %v859 = vunpack.c.l.bf16 %v333
        %v860 = vunpack.c.h.bf16 %v333
        %v861 = vunpack.c.l.bf16 %v334
        %v862 = vunpack.c.h.bf16 %v334
        %v863 = vunpack.c.l.bf16 %v335
        %v864 = vunpack.c.h.bf16 %v335
        %v865 = vadd.f32 %v839, %v857
        %v866 = vadd.f32 %v841, %v858
        %v867 = vadd.f32 %v843, %v859
        %v868 = vadd.f32 %v845, %v860
        %v869 = vadd.f32 %v849, %v861
        %v870 = vadd.f32 %v851, %v862
        %v871 = vadd.f32 %v853, %v863
        %v872 = vadd.f32 %v855, %v864
        %v873 = vmax.f32 %v865, 0.0
        %v874 = vmax.f32 %v866, 0.0
        %v875 = vmax.f32 %v867, 0.0
        %v876 = vmax.f32 %v868, 0.0
        %v877 = vmax.f32 %v869, 0.0
        %v878 = vmax.f32 %v870, 0.0
        %v879 = vmax.f32 %v871, 0.0
        %v880 = vmax.f32 %v872, 0.0
        %881 = vst [vmem:[%s325] sm:$0xff] %v873
        %882 = vst [vmem:[%s325 + $0x8] sm:$0xff] %v874
        %883 = vst [vmem:[%s325 + $0x10] sm:$0xff] %v875
        %884 = vst [vmem:[%s325 + $0x18] sm:$0xff] %v876
        %885 = vst [vmem:[%s325 + $0x20] sm:$0xff] %v877
        %886 = vst [vmem:[%s325 + $0x28] sm:$0xff] %v878
        %887 = vst [vmem:[%s325 + $0x30] sm:$0xff] %v879
        %888 = vst [vmem:[%s325 + $0x38] sm:$0xff] %v880
        %s889 = sand.u32 %s225, 1
        %s890 = scalar_lea.sflag [#allocation3], %s889
        %s891 = sand.u32 %s225, 1
        %s892 = smul.addr %s891, 64
        %s893 = scalar_lea.vmem [#allocation2], %s892
        // Predicated region
        $region57: #{tpu_custom_call.1} parent=55 // pred_check
          %p894 = pneg %p235
        $region58: #{tpu_custom_call.1} parent=55 // pred_check_branch
          %896 = sbr.rel (%p894) target = $region60
        $region59: #{tpu_custom_call.1} parent=55 // pred_region
          %s898 = ssub.s32 1024, 1024
          %899 = vsyncadd %s890, %s898
          %s900 = smul.addr %s23, 8
          %s901 = smul.addr %s900, 128
          %s902 = scalar_lea.hbm %s9, %s901
          %s903 = sshll.u32 %s893, 4
          %s904 = int_to_ptr.vmem [resolvable:$true] %s903
          %909 = dma.vmem_to_hbm [thread:$0]  %s904, 1024, %s902, %s890, 256, 256, 16
        $region60: #{tpu_custom_call.1} parent=55 // pred_fallthru
          _
      $region56: #{tpu_custom_call.1} parent=5 // pred_fallthru
        _
      %p910 = scmp.le.s32.totalorder 2, %s18
      // Predicated region
      $region61: #{tpu_custom_call.1} parent=5 // pred_check
        %p911 = pneg %p910
      $region62: #{tpu_custom_call.1} parent=5 // pred_check_branch
        %913 = sbr.rel (%p911) target = $region64
      $region63: #{tpu_custom_call.1} parent=5 // pred_region
        %s914 = ssub.s32 %s18, 2
        // Predicated region
        $region65: #{tpu_custom_call.1} parent=63 // pred_check
          %p915 = pneg %p241
        $region66: #{tpu_custom_call.1} parent=63 // pred_check_branch
          %917 = sbr.rel (%p915) target = $region68
        $region67: #{tpu_custom_call.1} parent=63 // pred_region
          %s918 = sand.u32 %s226, 1
          %s919 = scalar_lea.sflag [#allocation3], %s918
          %s920 = sand.u32 %s226, 1
          %s921 = smul.addr %s920, 64
          %s922 = scalar_lea.vmem [#allocation2], %s921
          %923 = dma.done %s919, 1024
        $region68: #{tpu_custom_call.1} parent=63 // pred_fallthru
          _
      $region64: #{tpu_custom_call.1} parent=5 // pred_fallthru
        _
    $region6: #{tpu_custom_call.1} parent=1 // loop_footer
      %s22 = sadd.s32 1, %s18
    $region7: #{tpu_custom_call.1} parent=1 // loop_footer_branch
      %17 = sbr.rel target = $region3
    $region8: #{tpu_custom_call.1} parent=1 // loop_exit
      _
    %924 = vsyncpa [#allocation3], 1
    %s925 = scalar_lea.sflag [#allocation3], 1
    %926 = vsyncpa %s925, 1

</llo_original>
